<compile_context>
chip_gen: v5e
topology: v5e:2x2
jax: 0.10.0
libtpu: 0.0.40
codegen_flags: <defaults>
</compile_context>

<pallas_src>
import functools

import jax
import jax.numpy as jnp
from jax.experimental import pallas as pl
from jax.experimental.pallas import tpu as pltpu

FOCAL_LENGTH = 5000.0
_LANE = 128
_MAX_TILE_ROWS = 512   # 512 rows * 128 lanes = 64K points / tile:
                       #   in 3*64K*4B = 768 KiB, out 512 KiB, double-buffered
                       #   ~2.5 MiB total -> fits comfortably on v5e/v6e/v7x.


def _round_up(x: int, m: int) -> int:
    return ((x + m - 1) // m) * m


def _camera_kernel(rot_ref, trans_ref, fx_ref, fy_ref, ctr_ref,
                   pts_ref, out_ref):
    """One grid step = (batch b, point-tile n).

    rot_ref   : SMEM (B*9,)  row-major 3x3 rotations
    trans_ref : SMEM (B*3,)
    fx_ref    : SMEM (B,)
    fy_ref    : SMEM (B,)
    ctr_ref   : SMEM (B*2,)
    pts_ref   : VMEM (1, 3, TR, 128)  dense x / y / z slabs
    out_ref   : VMEM (1, 2, TR, 128)
    """
    b = pl.program_id(0)

    px = pts_ref[0, 0]            # (TR, 128) dense vreg tiles
    py = pts_ref[0, 1]
    pz = pts_ref[0, 2]

    rb = b * 9
    r00 = rot_ref[rb + 0]; r01 = rot_ref[rb + 1]; r02 = rot_ref[rb + 2]
    r10 = rot_ref[rb + 3]; r11 = rot_ref[rb + 4]; r12 = rot_ref[rb + 5]
    r20 = rot_ref[rb + 6]; r21 = rot_ref[rb + 7]; r22 = rot_ref[rb + 8]
    tb = b * 3
    t0 = trans_ref[tb + 0]; t1 = trans_ref[tb + 1]; t2 = trans_ref[tb + 2]
    fx = fx_ref[b]; fy = fy_ref[b]
    cx = ctr_ref[b * 2 + 0]; cy = ctr_ref[b * 2 + 1]

    # camera_transform @ [p; 1] -- last row of the 4x4 is [0,0,0,1], dropped.
    x = r00 * px + r01 * py + r02 * pz + t0
    y = r10 * px + r11 * py + r12 * pz + t1
    z = r20 * px + r21 * py + r22 * pz + t2

    # One exact reciprocal shared by both coordinates; fold focal length in.
    inv_z = 1.0 / z

    out_ref[0, 0, :, :] = x * (fx * inv_z) + cx
    out_ref[0, 1, :, :] = y * (fy * inv_z) + cy


@functools.partial(jax.jit, static_argnames=("max_tile_rows",))
def perspective_camera_holo_channel_major(points_cm, rotation, translation,
                                          focal_length_x, focal_length_y,
                                          center, *,
                                          max_tile_rows=_MAX_TILE_ROWS):
    """Channel-major entry: points (B, 3, N) -> image points (B, 2, N).

    No HBM layout copies when N is already a multiple of 1024 (reshapes are
    free); otherwise points are padded up to the lane/tile boundary.
    """
    B, C, N = points_cm.shape
    assert C == 3
    dtype = points_cm.dtype

    # Rows of 128 lanes, kept a multiple of 8 so blocks are sublane-aligned.
    nr = _round_up((N + _LANE - 1) // _LANE, 8)
    tile_rows = min(nr, max_tile_rows)
    nr_pad = _round_up(nr, tile_rows)
    n_pad = nr_pad * _LANE

    pts = points_cm
    if n_pad != N:
        # Pad with 1.0 so padded z stays away from the perspective divide.
        pts = jnp.pad(points_cm, ((0, 0), (0, 0), (0, n_pad - N)),
                      constant_values=1.0)
    pts4 = pts.reshape(B, 3, nr_pad, _LANE)

    # Flatten per-batch parameters to 1-D so SMEM is not (8,128)-padded.
    rot_flat = rotation.reshape(B * 9).astype(dtype)
    trans_flat = translation.reshape(B * 3).astype(dtype)
    ctr_flat = center.reshape(B * 2).astype(dtype)
    fx = focal_length_x.reshape(B).astype(dtype)
    fy = focal_length_y.reshape(B).astype(dtype)

    n_tiles = nr_pad // tile_rows
    smem = pl.BlockSpec(memory_space=pltpu.MemorySpace.SMEM)

    out4 = pl.pallas_call(
        _camera_kernel,
        out_shape=jax.ShapeDtypeStruct((B, 2, nr_pad, _LANE), dtype),
        grid_spec=pltpu.PrefetchScalarGridSpec(
            num_scalar_prefetch=0,
            grid=(B, n_tiles),
            in_specs=[
                smem, smem, smem, smem, smem,                      # camera params
                pl.BlockSpec((1, 3, tile_rows, _LANE),
                             lambda b, n: (b, 0, n, 0)),           # points
            ],
            out_specs=pl.BlockSpec((1, 2, tile_rows, _LANE),
                                   lambda b, n: (b, 0, n, 0)),
        ),
        compiler_params=pltpu.CompilerParams(
            dimension_semantics=("parallel", "parallel")),
        cost_estimate=pl.CostEstimate(
            flops=26 * B * n_pad,
            transcendentals=B * n_pad,
            bytes_accessed=20 * B * n_pad),
    )(rot_flat, trans_flat, fx, fy, ctr_flat, pts4)

    out = out4.reshape(B, 2, n_pad)
    return out[:, :, :N] if n_pad != N else out


@functools.partial(jax.jit, static_argnames=("max_tile_rows",))
def perspective_camera_holo(points, rotation, translation,
                            focal_length_x, focal_length_y, center, *,
                            max_tile_rows=_MAX_TILE_ROWS):
    """PyTorch-layout entry: points (B, N, 3) -> image points (B, N, 2).

    The two transposes here exist only to honor the torch module's layout;
    use `perspective_camera_holo_channel_major` for the zero-copy path.
    """
    pts_cm = jnp.transpose(points, (0, 2, 1))                      # (B, 3, N)
    out_cm = perspective_camera_holo_channel_major(
        pts_cm, rotation, translation, focal_length_x, focal_length_y,
        center, max_tile_rows=max_tile_rows)
    return jnp.transpose(out_cm, (0, 2, 1))                        # (B, N, 2)


def _reference(points, rotation, translation, fx, fy, center):
    """Pure-JAX mirror of the PyTorch forward (correctness check)."""
    proj = jnp.einsum('bij,bnj->bni', rotation, points) + translation[:, None, :]
    img = proj[..., :2] / proj[..., 2:3]
    focal = jnp.stack([fx, fy], axis=-1)                           # (B, 2)
    return img * focal[:, None, :] + center[:, None, :]


if __name__ == "__main__":
    dtype = jnp.float32
    key = jax.random.PRNGKey(0)
    k_pts, k_rot, k_trans, k_ctr, k_pts2 = jax.random.split(key, 5)

    B, N = 2, 1024
    points = jax.random.normal(k_pts, (B, N, 3), dtype=dtype)
    points = points.at[..., 2].add(5.0)      # keep depth well away from zero

    rotation = (jnp.eye(3, dtype=dtype)[None].repeat(B, axis=0)
                + 0.01 * jax.random.normal(k_rot, (B, 3, 3), dtype=dtype))
    translation = 0.1 * jax.random.normal(k_trans, (B, 3), dtype=dtype)
    translation = translation.at[:, 2].add(2.0)
    focal_length_x = jnp.full((B,), FOCAL_LENGTH, dtype=dtype)
    focal_length_y = jnp.full((B,), FOCAL_LENGTH, dtype=dtype)
    center = 10.0 * jax.random.normal(k_ctr, (B, 2), dtype=dtype)

    # 1) PyTorch-layout wrapper, lane-aligned N.
    out = jax.block_until_ready(
        perspective_camera_holo(points, rotation, translation,
                                focal_length_x, focal_length_y, center))
    ref = _reference(points, rotation, translation,
                     focal_length_x, focal_length_y, center)
    assert out.shape == (B, N, 2)
    assert jnp.allclose(out, ref, rtol=1e-5, atol=1e-3), "mismatch (aligned N)"

    # 2) Ragged N exercises the pad-to-lane/tile path.
    N2 = 520
    points2 = jax.random.normal(k_pts2, (B, N2, 3), dtype=dtype)
    points2 = points2.at[..., 2].add(5.0)
    out2 = jax.block_until_ready(
        perspective_camera_holo(points2, rotation, translation,
                                focal_length_x, focal_length_y, center))
    ref2 = _reference(points2, rotation, translation,
                      focal_length_x, focal_length_y, center)
    assert out2.shape == (B, N2, 2)
    assert jnp.allclose(out2, ref2, rtol=1e-5, atol=1e-3), "mismatch (ragged N)"

    # 3) Zero-copy channel-major entry produces the same values.
    out_cm = jax.block_until_ready(
        perspective_camera_holo_channel_major(
            jnp.transpose(points, (0, 2, 1)), rotation, translation,
            focal_length_x, focal_length_y, center))
    assert jnp.allclose(jnp.transpose(out_cm, (0, 2, 1)), ref,
                        rtol=1e-5, atol=1e-3), "mismatch (channel-major)"

    print("KERNEL_OK")
</pallas_src>

<mosaic_0001>
module attributes {stable_mosaic.version = 11 : i64} {
  func.func @_camera_kernel(%arg0: i32, %arg1: i32, %arg2: memref<18xf32, #tpu.memory_space<smem>>, %arg3: memref<6xf32, #tpu.memory_space<smem>>, %arg4: memref<2xf32, #tpu.memory_space<smem>>, %arg5: memref<2xf32, #tpu.memory_space<smem>>, %arg6: memref<4xf32, #tpu.memory_space<smem>>, %arg7: memref<1x3x8x128xf32, #tpu.memory_space<vmem>>, %arg8: memref<1x2x8x128xf32, #tpu.memory_space<vmem>>) attributes {dimension_semantics = [#tpu.dimension_semantics<parallel>, #tpu.dimension_semantics<parallel>], iteration_bounds = array<i64: 2, 1>, scalar_prefetch = 0 : i64, scratch_operands = 0 : i64, tpu.core_type = #tpu.core_type<tc>, window_params = [{transform_indices = @transform_0, window_bounds = array<i64: 18>}, {transform_indices = @transform_1, window_bounds = array<i64: 6>}, {transform_indices = @transform_2, window_bounds = array<i64: 2>}, {transform_indices = @transform_3, window_bounds = array<i64: 2>}, {transform_indices = @transform_4, window_bounds = array<i64: 4>}, {transform_indices = @transform_5, window_bounds = array<i64: 1, 3, 8, 128>}, {transform_indices = @transform_6, window_bounds = array<i64: 1, 2, 8, 128>}]} {
    %c0 = arith.constant 0 : index
    %c0_0 = arith.constant 0 : index
    %c0_1 = arith.constant 0 : index
    %c0_2 = arith.constant 0 : index
    %0 = vector.load %arg7[%c0, %c0_0, %c0_1, %c0_2] : memref<1x3x8x128xf32, #tpu.memory_space<vmem>>, vector<1x1x8x128xf32>
    %1 = vector.shape_cast %0 : vector<1x1x8x128xf32> to vector<8x128xf32>
    %c0_3 = arith.constant 0 : index
    %c1 = arith.constant 1 : index
    %c0_4 = arith.constant 0 : index
    %c0_5 = arith.constant 0 : index
    %2 = vector.load %arg7[%c0_3, %c1, %c0_4, %c0_5] : memref<1x3x8x128xf32, #tpu.memory_space<vmem>>, vector<1x1x8x128xf32>
    %3 = vector.shape_cast %2 : vector<1x1x8x128xf32> to vector<8x128xf32>
    %c0_6 = arith.constant 0 : index
    %c2 = arith.constant 2 : index
    %c0_7 = arith.constant 0 : index
    %c0_8 = arith.constant 0 : index
    %4 = vector.load %arg7[%c0_6, %c2, %c0_7, %c0_8] : memref<1x3x8x128xf32, #tpu.memory_space<vmem>>, vector<1x1x8x128xf32>
    %5 = vector.shape_cast %4 : vector<1x1x8x128xf32> to vector<8x128xf32>
    %c9_i32 = arith.constant 9 : i32
    %6 = arith.muli %arg0, %c9_i32 : i32
    %c0_i32 = arith.constant 0 : i32
    %7 = arith.addi %6, %c0_i32 : i32
    %8 = arith.index_cast %7 : i32 to index
    %9 = memref.load %arg2[%8] : memref<18xf32, #tpu.memory_space<smem>>
    %c1_i32 = arith.constant 1 : i32
    %10 = arith.addi %6, %c1_i32 : i32
    %11 = arith.index_cast %10 : i32 to index
    %12 = memref.load %arg2[%11] : memref<18xf32, #tpu.memory_space<smem>>
    %c2_i32 = arith.constant 2 : i32
    %13 = arith.addi %6, %c2_i32 : i32
    %14 = arith.index_cast %13 : i32 to index
    %15 = memref.load %arg2[%14] : memref<18xf32, #tpu.memory_space<smem>>
    %c3_i32 = arith.constant 3 : i32
    %16 = arith.addi %6, %c3_i32 : i32
    %17 = arith.index_cast %16 : i32 to index
    %18 = memref.load %arg2[%17] : memref<18xf32, #tpu.memory_space<smem>>
    %c4_i32 = arith.constant 4 : i32
    %19 = arith.addi %6, %c4_i32 : i32
    %20 = arith.index_cast %19 : i32 to index
    %21 = memref.load %arg2[%20] : memref<18xf32, #tpu.memory_space<smem>>
    %c5_i32 = arith.constant 5 : i32
    %22 = arith.addi %6, %c5_i32 : i32
    %23 = arith.index_cast %22 : i32 to index
    %24 = memref.load %arg2[%23] : memref<18xf32, #tpu.memory_space<smem>>
    %c6_i32 = arith.constant 6 : i32
    %25 = arith.addi %6, %c6_i32 : i32
    %26 = arith.index_cast %25 : i32 to index
    %27 = memref.load %arg2[%26] : memref<18xf32, #tpu.memory_space<smem>>
    %c7_i32 = arith.constant 7 : i32
    %28 = arith.addi %6, %c7_i32 : i32
    %29 = arith.index_cast %28 : i32 to index
    %30 = memref.load %arg2[%29] : memref<18xf32, #tpu.memory_space<smem>>
    %c8_i32 = arith.constant 8 : i32
    %31 = arith.addi %6, %c8_i32 : i32
    %32 = arith.index_cast %31 : i32 to index
    %33 = memref.load %arg2[%32] : memref<18xf32, #tpu.memory_space<smem>>
    %c3_i32_9 = arith.constant 3 : i32
    %34 = arith.muli %arg0, %c3_i32_9 : i32
    %c0_i32_10 = arith.constant 0 : i32
    %35 = arith.addi %34, %c0_i32_10 : i32
    %36 = arith.index_cast %35 : i32 to index
    %37 = memref.load %arg3[%36] : memref<6xf32, #tpu.memory_space<smem>>
    %c1_i32_11 = arith.constant 1 : i32
    %38 = arith.addi %34, %c1_i32_11 : i32
    %39 = arith.index_cast %38 : i32 to index
    %40 = memref.load %arg3[%39] : memref<6xf32, #tpu.memory_space<smem>>
    %c2_i32_12 = arith.constant 2 : i32
    %41 = arith.addi %34, %c2_i32_12 : i32
    %42 = arith.index_cast %41 : i32 to index
    %43 = memref.load %arg3[%42] : memref<6xf32, #tpu.memory_space<smem>>
    %44 = arith.index_cast %arg0 : i32 to index
    %45 = memref.load %arg4[%44] : memref<2xf32, #tpu.memory_space<smem>>
    %46 = arith.index_cast %arg0 : i32 to index
    %47 = memref.load %arg5[%46] : memref<2xf32, #tpu.memory_space<smem>>
    %c2_i32_13 = arith.constant 2 : i32
    %48 = arith.muli %arg0, %c2_i32_13 : i32
    %c0_i32_14 = arith.constant 0 : i32
    %49 = arith.addi %48, %c0_i32_14 : i32
    %50 = arith.index_cast %49 : i32 to index
    %51 = memref.load %arg6[%50] : memref<4xf32, #tpu.memory_space<smem>>
    %c2_i32_15 = arith.constant 2 : i32
    %52 = arith.muli %arg0, %c2_i32_15 : i32
    %c1_i32_16 = arith.constant 1 : i32
    %53 = arith.addi %52, %c1_i32_16 : i32
    %54 = arith.index_cast %53 : i32 to index
    %55 = memref.load %arg6[%54] : memref<4xf32, #tpu.memory_space<smem>>
    %56 = vector.broadcast %9 : f32 to vector<8x128xf32>
    %57 = arith.mulf %56, %1 : vector<8x128xf32>
    %58 = vector.broadcast %12 : f32 to vector<8x128xf32>
    %59 = arith.mulf %58, %3 : vector<8x128xf32>
    %60 = arith.addf %57, %59 : vector<8x128xf32>
    %61 = vector.broadcast %15 : f32 to vector<8x128xf32>
    %62 = arith.mulf %61, %5 : vector<8x128xf32>
    %63 = arith.addf %60, %62 : vector<8x128xf32>
    %64 = vector.broadcast %37 : f32 to vector<8x128xf32>
    %65 = arith.addf %63, %64 : vector<8x128xf32>
    %66 = vector.broadcast %18 : f32 to vector<8x128xf32>
    %67 = arith.mulf %66, %1 : vector<8x128xf32>
    %68 = vector.broadcast %21 : f32 to vector<8x128xf32>
    %69 = arith.mulf %68, %3 : vector<8x128xf32>
    %70 = arith.addf %67, %69 : vector<8x128xf32>
    %71 = vector.broadcast %24 : f32 to vector<8x128xf32>
    %72 = arith.mulf %71, %5 : vector<8x128xf32>
    %73 = arith.addf %70, %72 : vector<8x128xf32>
    %74 = vector.broadcast %40 : f32 to vector<8x128xf32>
    %75 = arith.addf %73, %74 : vector<8x128xf32>
    %76 = vector.broadcast %27 : f32 to vector<8x128xf32>
    %77 = arith.mulf %76, %1 : vector<8x128xf32>
    %78 = vector.broadcast %30 : f32 to vector<8x128xf32>
    %79 = arith.mulf %78, %3 : vector<8x128xf32>
    %80 = arith.addf %77, %79 : vector<8x128xf32>
    %81 = vector.broadcast %33 : f32 to vector<8x128xf32>
    %82 = arith.mulf %81, %5 : vector<8x128xf32>
    %83 = arith.addf %80, %82 : vector<8x128xf32>
    %84 = vector.broadcast %43 : f32 to vector<8x128xf32>
    %85 = arith.addf %83, %84 : vector<8x128xf32>
    %cst = arith.constant 1.000000e+00 : f32
    %86 = vector.broadcast %cst : f32 to vector<8x128xf32>
    %87 = arith.divf %86, %85 : vector<8x128xf32>
    %88 = vector.broadcast %45 : f32 to vector<8x128xf32>
    %89 = arith.mulf %88, %87 : vector<8x128xf32>
    %90 = arith.mulf %65, %89 : vector<8x128xf32>
    %91 = vector.broadcast %51 : f32 to vector<8x128xf32>
    %92 = arith.addf %90, %91 : vector<8x128xf32>
    %c0_17 = arith.constant 0 : index
    %c0_18 = arith.constant 0 : index
    %c0_19 = arith.constant 0 : index
    %c0_20 = arith.constant 0 : index
    %93 = vector.load %arg8[%c0_17, %c0_18, %c0_19, %c0_20] : memref<1x2x8x128xf32, #tpu.memory_space<vmem>>, vector<1x1x8x128xf32>
    %94 = vector.shape_cast %93 : vector<1x1x8x128xf32> to vector<8x128xf32>
    %95 = vector.shape_cast %92 : vector<8x128xf32> to vector<1x1x8x128xf32>
    tpu.vector_store %arg8[%c0_17, %c0_18, %c0_19, %c0_20], %95 {strides = array<i32>} : memref<1x2x8x128xf32, #tpu.memory_space<vmem>>, vector<1x1x8x128xf32>,
    %96 = vector.broadcast %47 : f32 to vector<8x128xf32>
    %97 = arith.mulf %96, %87 : vector<8x128xf32>
    %98 = arith.mulf %75, %97 : vector<8x128xf32>
    %99 = vector.broadcast %55 : f32 to vector<8x128xf32>
    %100 = arith.addf %98, %99 : vector<8x128xf32>
    %c0_21 = arith.constant 0 : index
    %c1_22 = arith.constant 1 : index
    %c0_23 = arith.constant 0 : index
    %c0_24 = arith.constant 0 : index
    %101 = vector.load %arg8[%c0_21, %c1_22, %c0_23, %c0_24] : memref<1x2x8x128xf32, #tpu.memory_space<vmem>>, vector<1x1x8x128xf32>
    %102 = vector.shape_cast %101 : vector<1x1x8x128xf32> to vector<8x128xf32>
    %103 = vector.shape_cast %100 : vector<8x128xf32> to vector<1x1x8x128xf32>
    tpu.vector_store %arg8[%c0_21, %c1_22, %c0_23, %c0_24], %103 {strides = array<i32>} : memref<1x2x8x128xf32, #tpu.memory_space<vmem>>, vector<1x1x8x128xf32>,
    return
  }
  func.func @transform_0(%arg0: i32, %arg1: i32) -> i32 {
    %c0_i32 = arith.constant 0 : i32
    %c0_i32_0 = arith.constant 0 : i32
    return %c0_i32 : i32
  }
  func.func @transform_1(%arg0: i32, %arg1: i32) -> i32 {
    %c0_i32 = arith.constant 0 : i32
    %c0_i32_0 = arith.constant 0 : i32
    return %c0_i32 : i32
  }
  func.func @transform_2(%arg0: i32, %arg1: i32) -> i32 {
    %c0_i32 = arith.constant 0 : i32
    %c0_i32_0 = arith.constant 0 : i32
    return %c0_i32 : i32
  }
  func.func @transform_3(%arg0: i32, %arg1: i32) -> i32 {
    %c0_i32 = arith.constant 0 : i32
    %c0_i32_0 = arith.constant 0 : i32
    return %c0_i32 : i32
  }
  func.func @transform_4(%arg0: i32, %arg1: i32) -> i32 {
    %c0_i32 = arith.constant 0 : i32
    %c0_i32_0 = arith.constant 0 : i32
    return %c0_i32 : i32
  }
  func.func @transform_5(%arg0: i32, %arg1: i32) -> (i32, i32, i32, i32) {
    %c0_i32 = arith.constant 0 : i32
    %c0_i32_0 = arith.constant 0 : i32
    %c0_i32_1 = arith.constant 0 : i32
    return %arg0, %c0_i32, %arg1, %c0_i32_0 : i32, i32, i32, i32
  }
  func.func @transform_6(%arg0: i32, %arg1: i32) -> (i32, i32, i32, i32) {
    %c0_i32 = arith.constant 0 : i32
    %c0_i32_0 = arith.constant 0 : i32
    %c0_i32_1 = arith.constant 0 : i32
    return %arg0, %c0_i32, %arg1, %c0_i32_0 : i32, i32, i32, i32
  }
}

</mosaic_0001>

<llo_original>
// kernel: perspective_camera_holo_channel_major.1
$region0: #{perspective_camera_holo_channel_major.1}
  #allocation0 [shape = 'u32[]', space=smem, size = 0x4, offset = 0x4, fixed_abs, tag = 'smem constant byte address 0x4 - core index']
  #allocation1 [shape = 'u32[72,128]{1,0:T(1,128)}', space=vmem, size = 0x9000, scoped, tag = 'internal scratch']
  %s0 = inlined_call_operand.vmem [shape: f32[18], index: 0, kind: input, shape index: {}]
  %s1 = inlined_call_operand.vmem [shape: f32[6], index: 1, kind: input, shape index: {}]
  %s2 = inlined_call_operand.vmem [shape: f32[2], index: 2, kind: input, shape index: {}]
  %s3 = inlined_call_operand.vmem [shape: f32[2], index: 3, kind: input, shape index: {}]
  %s4 = inlined_call_operand.vmem [shape: f32[4], index: 4, kind: input, shape index: {}]
  %s5 = inlined_call_operand.vmem [shape: f32[2,3,8,128], index: 5, kind: input, shape index: {}]
  %s6 = inlined_call_operand.vmem [shape: f32[2,2,8,128], index: 6, kind: output, shape index: {}]
  %s7 = sld [smem:[#allocation0]]
  $region77: #{perspective_camera_holo_channel_major.1} parent=0
    _
  %s9 = ssub.s32 1, %s7
  %s10 = scalar_select 0, %s9, %s7
  $region1: #{perspective_camera_holo_channel_major.1} parent=0
    #allocation2 [shape = 'u8[512]{0}', space=smem, size = 0x200, scoped, tag = 'input window, operand 0, single buffered']
    #allocation3 [shape = 's32[2]{0}', space=sflag, size = 0x8, scoped, tag = 'scoped memory for perspective_camera_holo_channel_major.1']
    #allocation4 [shape = 'u8[512]{0}', space=smem, size = 0x200, scoped, tag = 'input window, operand 1, single buffered']
    #allocation5 [shape = 's32[1]{0}', space=sflag, size = 0x4, scoped, tag = 'scoped memory for perspective_camera_holo_channel_major.1']
    #allocation6 [shape = 'u8[512]{0}', space=smem, size = 0x200, scoped, tag = 'input window, operand 2, single buffered']
    #allocation7 [shape = 'u8[512]{0}', space=smem, size = 0x200, scoped, tag = 'input window, operand 3, single buffered']
    #allocation8 [shape = 's32[1]{0}', space=sflag, size = 0x4, scoped, tag = 'scoped memory for perspective_camera_holo_channel_major.1']
    #allocation9 [shape = 'u8[512]{0}', space=smem, size = 0x200, scoped, tag = 'input window, operand 4, single buffered']
    %11 = vsyncpa [#allocation3], 0
    %12 = vsyncpa [#allocation5], 0
    %13 = vsyncpa [#allocation8], 0
    loop: start=0, step=1, limit=4
    $region2: #{perspective_camera_holo_channel_major.1} parent=1 // loop_pre_header
      _
    $region3: #{perspective_camera_holo_channel_major.1} parent=1 // loop_header
      %s15 = sphi 0, %s19
      %p16 = scmp.ge.s32.totalorder %s15, 4
      %s22 = sphi 0, %s34
      %s23 = sphi 0, %s30
      %s24 = sphi 0, %s22
      %s25 = sphi 0, %s23
      %s26 = sphi 0, %s24
      %s27 = sphi 0, %s25
      %s35 = sphi 0, %s35
      %s37 = sphi 0, %s35
      %s38 = sphi 0, %s37
      %s52 = sphi 0, %s38
      %s56 = sphi 0, %s56
      %s58 = sphi 0, %s56
      %s59 = sphi 0, %s58
      %s73 = sphi 0, %s59
      %s77 = sphi 0, %s77
      %s79 = sphi 0, %s77
      %s80 = sphi 0, %s79
      %s94 = sphi 0, %s80
      %s98 = sphi 0, %s98
      %s100 = sphi 0, %s98
      %s101 = sphi 0, %s100
      %s115 = sphi 0, %s101
      %s119 = sphi 0, %s119
      %s121 = sphi 0, %s119
      %s122 = sphi 0, %s121
      %s136 = sphi 0, %s122
      %s144 = sphi 0, %s146
      %s147 = sphi 0, %s144
      %s148 = sphi 0, %s147
      %s164 = sphi 0, %s148
      %s172 = sphi 0, %s174
      %s175 = sphi 0, %s172
      %s176 = sphi 0, %s175
      %s192 = sphi 0, %s176
    $region4: #{perspective_camera_holo_channel_major.1} parent=1 // loop_header_branch
      %18 = sbr.rel (%p16) target = $region8
    $region5: #{perspective_camera_holo_channel_major.1} parent=1 // loop_body
      %s20 = ssub.s32 %s15, 1
      %s21 = ssub.s32 %s15, 2
      %s28 = sadd.s32 1, %s23
      %p29 = scmp.ge.s32.totalorder %s28, 1
      %s30 = scalar_select %p29, 0, %s28
      %s31 = sadd.s32 1, %s22
      %s32 = scalar_select %p29, %s31, %s22
      %p33 = scmp.ge.s32.totalorder %s32, 2
      %s34 = scalar_select %p33, 0, %s32
      %s36 = sadd.s32 %s35, 1
      %p39 = scmp.eq.s32.totalorder %s15, 1
      %p40 = scmp.ne.s32.totalorder %s35, %s37
      %p41 = scmp.eq.s32.totalorder %s15, 0
      %p42 = por %p40, %p41
      %p43 = scmp.ne.s32.totalorder %s35, %s37
      %p44 = scmp.eq.s32.totalorder %s20, 1
      %p45 = por %p43, %p44
      %p46 = scmp.ne.s32.totalorder %s37, %s38
      %p47 = scmp.eq.s32.totalorder %s20, 0
      %p48 = por %p46, %p47
      %p49 = scmp.ne.s32.totalorder %s37, %s38
      %p50 = scmp.eq.s32.totalorder %s21, 1
      %p51 = por %p49, %p50
      %p53 = scmp.ne.s32.totalorder %s38, %s52
      %p54 = scmp.eq.s32.totalorder %s21, 0
      %p55 = por %p53, %p54
      %s57 = sadd.s32 %s56, 1
      %p60 = scmp.eq.s32.totalorder %s15, 1
      %p61 = scmp.ne.s32.totalorder %s56, %s58
      %p62 = scmp.eq.s32.totalorder %s15, 0
      %p63 = por %p61, %p62
      %p64 = scmp.ne.s32.totalorder %s56, %s58
      %p65 = scmp.eq.s32.totalorder %s20, 1
      %p66 = por %p64, %p65
      %p67 = scmp.ne.s32.totalorder %s58, %s59
      %p68 = scmp.eq.s32.totalorder %s20, 0
      %p69 = por %p67, %p68
      %p70 = scmp.ne.s32.totalorder %s58, %s59
      %p71 = scmp.eq.s32.totalorder %s21, 1
      %p72 = por %p70, %p71
      %p74 = scmp.ne.s32.totalorder %s59, %s73
      %p75 = scmp.eq.s32.totalorder %s21, 0
      %p76 = por %p74, %p75
      %s78 = sadd.s32 %s77, 1
      %p81 = scmp.eq.s32.totalorder %s15, 1
      %p82 = scmp.ne.s32.totalorder %s77, %s79
      %p83 = scmp.eq.s32.totalorder %s15, 0
      %p84 = por %p82, %p83
      %p85 = scmp.ne.s32.totalorder %s77, %s79
      %p86 = scmp.eq.s32.totalorder %s20, 1
      %p87 = por %p85, %p86
      %p88 = scmp.ne.s32.totalorder %s79, %s80
      %p89 = scmp.eq.s32.totalorder %s20, 0
      %p90 = por %p88, %p89
      %p91 = scmp.ne.s32.totalorder %s79, %s80
      %p92 = scmp.eq.s32.totalorder %s21, 1
      %p93 = por %p91, %p92
      %p95 = scmp.ne.s32.totalorder %s80, %s94
      %p96 = scmp.eq.s32.totalorder %s21, 0
      %p97 = por %p95, %p96
      %s99 = sadd.s32 %s98, 1
      %p102 = scmp.eq.s32.totalorder %s15, 1
      %p103 = scmp.ne.s32.totalorder %s98, %s100
      %p104 = scmp.eq.s32.totalorder %s15, 0
      %p105 = por %p103, %p104
      %p106 = scmp.ne.s32.totalorder %s98, %s100
      %p107 = scmp.eq.s32.totalorder %s20, 1
      %p108 = por %p106, %p107
      %p109 = scmp.ne.s32.totalorder %s100, %s101
      %p110 = scmp.eq.s32.totalorder %s20, 0
      %p111 = por %p109, %p110
      %p112 = scmp.ne.s32.totalorder %s100, %s101
      %p113 = scmp.eq.s32.totalorder %s21, 1
      %p114 = por %p112, %p113
      %p116 = scmp.ne.s32.totalorder %s101, %s115
      %p117 = scmp.eq.s32.totalorder %s21, 0
      %p118 = por %p116, %p117
      %s120 = sadd.s32 %s119, 1
      %p123 = scmp.eq.s32.totalorder %s15, 1
      %p124 = scmp.ne.s32.totalorder %s119, %s121
      %p125 = scmp.eq.s32.totalorder %s15, 0
      %p126 = por %p124, %p125
      %p127 = scmp.ne.s32.totalorder %s119, %s121
      %p128 = scmp.eq.s32.totalorder %s20, 1
      %p129 = por %p127, %p128
      %p130 = scmp.ne.s32.totalorder %s121, %s122
      %p131 = scmp.eq.s32.totalorder %s20, 0
      %p132 = por %p130, %p131
      %p133 = scmp.ne.s32.totalorder %s121, %s122
      %p134 = scmp.eq.s32.totalorder %s21, 1
      %p135 = por %p133, %p134
      %p137 = scmp.ne.s32.totalorder %s122, %s136
      %p138 = scmp.eq.s32.totalorder %s21, 0
      %p139 = por %p137, %p138
      %s140 = ssub.s32 %s22, %s34
      %s141 = ssub.s32 %s23, %s30
      %s142 = sor.u32 %s140, %s141
      %p143 = scmp.eq.s32.totalorder %s142, 0
      %s145 = sadd.s32 %s144, 1
      %s146 = scalar_select %p143, %s144, %s145
      %p149 = pneg %p143
      %p150 = scmp.eq.s32.totalorder %s15, 1
      %p151 = por %p149, %p150
      %p152 = scmp.ne.s32.totalorder %s144, %s147
      %p153 = scmp.eq.s32.totalorder %s15, 0
      %p154 = por %p152, %p153
      %p155 = scmp.ne.s32.totalorder %s144, %s147
      %p156 = scmp.eq.s32.totalorder %s20, 1
      %p157 = por %p155, %p156
      %p158 = scmp.ne.s32.totalorder %s147, %s148
      %p159 = scmp.eq.s32.totalorder %s20, 0
      %p160 = por %p158, %p159
      %p161 = scmp.ne.s32.totalorder %s147, %s148
      %p162 = scmp.eq.s32.totalorder %s21, 1
      %p163 = por %p161, %p162
      %p165 = scmp.ne.s32.totalorder %s148, %s164
      %p166 = scmp.eq.s32.totalorder %s21, 0
      %p167 = por %p165, %p166
      %s168 = ssub.s32 %s22, %s34
      %s169 = ssub.s32 %s23, %s30
      %s170 = sor.u32 %s168, %s169
      %p171 = scmp.eq.s32.totalorder %s170, 0
      %s173 = sadd.s32 %s172, 1
      %s174 = scalar_select %p171, %s172, %s173
      %p177 = pneg %p171
      %p178 = scmp.eq.s32.totalorder %s15, 1
      %p179 = por %p177, %p178
      %p180 = scmp.ne.s32.totalorder %s172, %s175
      %p181 = scmp.eq.s32.totalorder %s15, 0
      %p182 = por %p180, %p181
      %p183 = scmp.ne.s32.totalorder %s172, %s175
      %p184 = scmp.eq.s32.totalorder %s20, 1
      %p185 = por %p183, %p184
      %p186 = scmp.ne.s32.totalorder %s175, %s176
      %p187 = scmp.eq.s32.totalorder %s20, 0
      %p188 = por %p186, %p187
      %p189 = scmp.ne.s32.totalorder %s175, %s176
      %p190 = scmp.eq.s32.totalorder %s21, 1
      %p191 = por %p189, %p190
      %p193 = scmp.ne.s32.totalorder %s176, %s192
      %p194 = scmp.eq.s32.totalorder %s21, 0
      %p195 = por %p193, %p194
      %p196 = scmp.le.s32.totalorder 1, %s15
      %p197 = scmp.lt.s32.totalorder %s15, 3
      %p198 = pnand %p196, %p197
      %p199 = pneg %p198
      // Predicated region
      $region9: #{perspective_camera_holo_channel_major.1} parent=5 // pred_check
        _
      $region10: #{perspective_camera_holo_channel_major.1} parent=5 // pred_check_branch
        %201 = sbr.rel (%p198) target = $region12
      $region11: #{perspective_camera_holo_channel_major.1} parent=5 // pred_region
        %s202 = ssub.s32 %s15, 1
        // Predicated region
        $region13: #{perspective_camera_holo_channel_major.1} parent=11 // pred_check
          %p203 = pneg %p48
        $region14: #{perspective_camera_holo_channel_major.1} parent=11 // pred_check_branch
          %205 = sbr.rel (%p203) target = $region16
        $region15: #{perspective_camera_holo_channel_major.1} parent=11 // pred_region
          %207 = vsyncadd [#allocation3], 0
          %s209 = sshll.u32 %s0, 4
          %s210 = int_to_ptr.vmem [resolvable:$true] %s209
          %212 = dma.vmem_to_smem %s210, 16, [#allocation2], [#allocation3]
        $region16: #{perspective_camera_holo_channel_major.1} parent=11 // pred_fallthru
          _
        // Predicated region
        $region17: #{perspective_camera_holo_channel_major.1} parent=11 // pred_check
          %p213 = pneg %p69
        $region18: #{perspective_camera_holo_channel_major.1} parent=11 // pred_check_branch
          %215 = sbr.rel (%p213) target = $region20
        $region19: #{perspective_camera_holo_channel_major.1} parent=11 // pred_region
          %217 = vsyncadd [#allocation5], 0
          %s219 = sshll.u32 %s1, 4
          %s220 = int_to_ptr.vmem [resolvable:$true] %s219
          %222 = dma.vmem_to_smem %s220, 16, [#allocation4], [#allocation5]
        $region20: #{perspective_camera_holo_channel_major.1} parent=11 // pred_fallthru
          _
        // Predicated region
        $region21: #{perspective_camera_holo_channel_major.1} parent=11 // pred_check
          %p223 = pneg %p90
        $region22: #{perspective_camera_holo_channel_major.1} parent=11 // pred_check_branch
          %225 = sbr.rel (%p223) target = $region24
        $region23: #{perspective_camera_holo_channel_major.1} parent=11 // pred_region
          %227 = vsyncadd [#allocation5], 0
          %s229 = sshll.u32 %s2, 4
          %s230 = int_to_ptr.vmem [resolvable:$true] %s229
          %232 = dma.vmem_to_smem %s230, 16, [#allocation6], [#allocation5]
        $region24: #{perspective_camera_holo_channel_major.1} parent=11 // pred_fallthru
          _
        // Predicated region
        $region25: #{perspective_camera_holo_channel_major.1} parent=11 // pred_check
          %p233 = pneg %p111
        $region26: #{perspective_camera_holo_channel_major.1} parent=11 // pred_check_branch
          %235 = sbr.rel (%p233) target = $region28
        $region27: #{perspective_camera_holo_channel_major.1} parent=11 // pred_region
          %237 = vsyncadd [#allocation8], 0
          %s239 = sshll.u32 %s3, 4
          %s240 = int_to_ptr.vmem [resolvable:$true] %s239
          %242 = dma.vmem_to_smem %s240, 16, [#allocation7], [#allocation8]
        $region28: #{perspective_camera_holo_channel_major.1} parent=11 // pred_fallthru
          _
        // Predicated region
        $region29: #{perspective_camera_holo_channel_major.1} parent=11 // pred_check
          %p243 = pneg %p132
        $region30: #{perspective_camera_holo_channel_major.1} parent=11 // pred_check_branch
          %245 = sbr.rel (%p243) target = $region32
        $region31: #{perspective_camera_holo_channel_major.1} parent=11 // pred_region
          %247 = vsyncadd [#allocation8], 0
          %s249 = sshll.u32 %s4, 4
          %s250 = int_to_ptr.vmem [resolvable:$true] %s249
          %252 = dma.vmem_to_smem %s250, 16, [#allocation9], [#allocation8]
        $region32: #{perspective_camera_holo_channel_major.1} parent=11 // pred_fallthru
          _
      $region12: #{perspective_camera_holo_channel_major.1} parent=5 // pred_fallthru
        _
      %p253 = scmp.lt.s32.totalorder %s15, 2
      // Predicated region
      $region33: #{perspective_camera_holo_channel_major.1} parent=5 // pred_check
        %p254 = pneg %p253
      $region34: #{perspective_camera_holo_channel_major.1} parent=5 // pred_check_branch
        %256 = sbr.rel (%p254) target = $region36
      $region35: #{perspective_camera_holo_channel_major.1} parent=5 // pred_region
        // Predicated region
        $region37: #{perspective_camera_holo_channel_major.1} parent=35 // pred_check
          %p257 = pneg %p154
        $region38: #{perspective_camera_holo_channel_major.1} parent=35 // pred_check_branch
          %259 = sbr.rel (%p257) target = $region40
        $region39: #{perspective_camera_holo_channel_major.1} parent=35 // pred_region
          %p260 = scmp.lt.s32.totalorder %s22, 1
          %s261 = scalar_select %p260, %s22, 1
          %p262 = scmp.lt.s32.totalorder %s23, 0
          %s263 = scalar_select %p262, %s23, 0
          %s264 = smul.addr %s261, 3
          %s265 = sadd.s32 %s263, %s264
          %s266 = smul.addr %s265, 8
          %s267 = scalar_lea.vmem %s5, %s266
        $region40: #{perspective_camera_holo_channel_major.1} parent=35 // pred_fallthru
          _
      $region36: #{perspective_camera_holo_channel_major.1} parent=5 // pred_fallthru
        _
      %p268 = scmp.le.s32.totalorder 1, %s15
      %p269 = scmp.lt.s32.totalorder %s15, 3
      %p270 = pnand %p268, %p269
      %p271 = pneg %p270
      // Predicated region
      $region41: #{perspective_camera_holo_channel_major.1} parent=5 // pred_check
        _
      $region42: #{perspective_camera_holo_channel_major.1} parent=5 // pred_check_branch
        %273 = sbr.rel (%p270) target = $region44
      $region43: #{perspective_camera_holo_channel_major.1} parent=5 // pred_region
        %s274 = ssub.s32 %s15, 1
        // Predicated region
        $region45: #{perspective_camera_holo_channel_major.1} parent=43 // pred_check
          %p275 = pneg %p48
        $region46: #{perspective_camera_holo_channel_major.1} parent=43 // pred_check_branch
          %277 = sbr.rel (%p275) target = $region48
        $region47: #{perspective_camera_holo_channel_major.1} parent=43 // pred_region
          %279 = dma.done [#allocation3], 16
        $region48: #{perspective_camera_holo_channel_major.1} parent=43 // pred_fallthru
          _
        // Predicated region
        $region49: #{perspective_camera_holo_channel_major.1} parent=43 // pred_check
          %p280 = pneg %p69
        $region50: #{perspective_camera_holo_channel_major.1} parent=43 // pred_check_branch
          %282 = sbr.rel (%p280) target = $region52
        $region51: #{perspective_camera_holo_channel_major.1} parent=43 // pred_region
          %284 = dma.done [#allocation5], 16
        $region52: #{perspective_camera_holo_channel_major.1} parent=43 // pred_fallthru
          _
        // Predicated region
        $region53: #{perspective_camera_holo_channel_major.1} parent=43 // pred_check
          %p285 = pneg %p90
        $region54: #{perspective_camera_holo_channel_major.1} parent=43 // pred_check_branch
          %287 = sbr.rel (%p285) target = $region56
        $region55: #{perspective_camera_holo_channel_major.1} parent=43 // pred_region
          %289 = dma.done [#allocation5], 16
        $region56: #{perspective_camera_holo_channel_major.1} parent=43 // pred_fallthru
          _
        // Predicated region
        $region57: #{perspective_camera_holo_channel_major.1} parent=43 // pred_check
          %p290 = pneg %p111
        $region58: #{perspective_camera_holo_channel_major.1} parent=43 // pred_check_branch
          %292 = sbr.rel (%p290) target = $region60
        $region59: #{perspective_camera_holo_channel_major.1} parent=43 // pred_region
          %294 = dma.done [#allocation8], 16
        $region60: #{perspective_camera_holo_channel_major.1} parent=43 // pred_fallthru
          _
        // Predicated region
        $region61: #{perspective_camera_holo_channel_major.1} parent=43 // pred_check
          %p295 = pneg %p132
        $region62: #{perspective_camera_holo_channel_major.1} parent=43 // pred_check_branch
          %297 = sbr.rel (%p295) target = $region64
        $region63: #{perspective_camera_holo_channel_major.1} parent=43 // pred_region
          %299 = dma.done [#allocation8], 16
        $region64: #{perspective_camera_holo_channel_major.1} parent=43 // pred_fallthru
          _
        %300 = sfence
        %p301 = pneg %p48
        %p302 = pneg %p45
        %p303 = pneg %p69
        %p304 = pneg %p66
        %p305 = pneg %p90
        %p306 = pneg %p87
        %p307 = pneg %p111
        %p308 = pneg %p108
        %p309 = pneg %p132
        %p310 = pneg %p129
        %p311 = scmp.lt.s32.totalorder %s24, 1
        %s312 = scalar_select %p311, %s24, 1
        %p313 = scmp.lt.s32.totalorder %s25, 0
        %s314 = scalar_select %p313, %s25, 0
        %s315 = smul.addr %s312, 3
        %s316 = sadd.s32 %s314, %s315
        %s317 = smul.addr %s316, 8
        %s318 = scalar_lea.vmem %s5, %s317
        %p319 = pneg %p160
        %p320 = pneg %p157
        %p321 = pneg %p188
        %p322 = pneg %p185
        %p323 = scmp.lt.s32.totalorder %s24, 1
        %s324 = scalar_select %p323, %s24, 1
        %p325 = scmp.lt.s32.totalorder %s25, 0
        %s326 = scalar_select %p325, %s25, 0
        %s327 = smul.addr %s324, 2
        %s328 = sadd.s32 %s326, %s327
        %s329 = smul.addr %s328, 8
        %s330 = scalar_lea.vmem %s6, %s329
        %p331 = scmp.lt.s32.totalorder %s24, 1
        %s332 = scalar_select %p331, %s24, 1
        %p333 = scmp.lt.s32.totalorder %s25, 0
        %s334 = scalar_select %p333, %s25, 0
        %s335 = smul.addr %s332, 3
        %s336 = sadd.s32 %s334, %s335
        %s337 = smul.addr %s336, 8
        %s338 = scalar_lea.vmem %s5, %s337
        %p339 = scmp.lt.s32.totalorder %s24, 1
        %s340 = scalar_select %p339, %s24, 1
        %p341 = scmp.lt.s32.totalorder %s25, 0
        %s342 = scalar_select %p341, %s25, 0
        %s343 = smul.addr %s340, 2
        %s344 = sadd.s32 %s342, %s343
        %s345 = smul.addr %s344, 8
        %s346 = scalar_lea.vmem %s6, %s345
        %v347 = vld [vmem:[%s338] sm:$0xff]
        %s348 = scalar_lea.vmem %s338, 8
        %v349 = vld [vmem:[%s348] sm:$0xff]
        %s350 = scalar_lea.vmem %s338, 16
        %v351 = vld [vmem:[%s350] sm:$0xff]
        %s352 = smul.u32 %s24, 9
        %s353 = sld [smem:[#allocation2 + %s352]]
        %s354 = sadd.s32 %s352, 1
        %s355 = sld [smem:[#allocation2 + %s354]]
        %s356 = sadd.s32 %s352, 2
        %s357 = sld [smem:[#allocation2 + %s356]]
        %s358 = sadd.s32 %s352, 3
        %s359 = sld [smem:[#allocation2 + %s358]]
        %s360 = sadd.s32 %s352, 4
        %s361 = sld [smem:[#allocation2 + %s360]]
        %s362 = sadd.s32 %s352, 5
        %s363 = sld [smem:[#allocation2 + %s362]]
        %s364 = sadd.s32 %s352, 6
        %s365 = sld [smem:[#allocation2 + %s364]]
        %s366 = sadd.s32 %s352, 7
        %s367 = sld [smem:[#allocation2 + %s366]]
        %s368 = sadd.s32 %s352, 8
        %s369 = sld [smem:[#allocation2 + %s368]]
        %s370 = smul.u32 %s24, 3
        %s371 = sld [smem:[#allocation4 + %s370]]
        %s372 = sadd.s32 %s370, 1
        %s373 = sld [smem:[#allocation4 + %s372]]
        %s374 = sadd.s32 %s370, 2
        %s375 = sld [smem:[#allocation4 + %s374]]
        %s376 = sld [smem:[#allocation6 + %s24]]
        %s377 = sld [smem:[#allocation7 + %s24]]
        %s378 = smul.u32 %s24, 2
        %s379 = sld [smem:[#allocation9 + %s378]]
        %s380 = sadd.s32 %s378, 1
        %s381 = sld [smem:[#allocation9 + %s380]]
        %v382 = vstv %s353
        %v383 = vmul.f32 %v382, %v347
        %v384 = vstv %s355
        %v385 = vmul.f32 %v384, %v349
        %v386 = vadd.f32 %v383, %v385
        %v387 = vstv %s357
        %v388 = vmul.f32 %v387, %v351
        %v389 = vadd.f32 %v386, %v388
        %v390 = vstv %s371
        %v391 = vadd.f32 %v389, %v390
        %v392 = vstv %s359
        %v393 = vmul.f32 %v392, %v347
        %v394 = vstv %s361
        %v395 = vmul.f32 %v394, %v349
        %v396 = vadd.f32 %v393, %v395
        %v397 = vstv %s363
        %v398 = vmul.f32 %v397, %v351
        %v399 = vadd.f32 %v396, %v398
        %v400 = vstv %s373
        %v401 = vadd.f32 %v399, %v400
        %v402 = vstv %s365
        %v403 = vmul.f32 %v402, %v347
        %v404 = vstv %s367
        %v405 = vmul.f32 %v404, %v349
        %v406 = vadd.f32 %v403, %v405
        %v407 = vstv %s369
        %v408 = vmul.f32 %v407, %v351
        %v409 = vadd.f32 %v406, %v408
        %v410 = vstv %s375
        %v411 = vadd.f32 %v409, %v410
        %v412 = vrcp.pop %v411
        %v413 = vmul.f32 %v411, %v412
        %v414 = vsub.f32 1.0, %v413
        %v415 = vmul.f32 %v412, %v414
        %v416 = vadd.f32 %v412, %v415
        %vm417 = vweird.f32 %v411
        %vm418 = vweird.f32 %v412
        %vm419 = vmor %vm417, %vm418
        %v420 = vsel %vm419, %v412, %v416
        %v421 = vand.u32 2147483647, %v411
        %vm422 = vcmp.eq.f32.partialorder %v421, 8.507059e+37
        %v423 = vand.u32 %v411, 2147483648
        %v424 = vor.u32 1.1754944e-38, %v423
        %v425 = vsel %vm422, %v424, %v420
        %v426 = vmul.f32 1.0, %v425
        %v427 = vstv %s376
        %v428 = vmul.f32 %v427, %v426
        %v429 = vmul.f32 %v391, %v428
        %v430 = vstv %s379
        %v431 = vadd.f32 %v429, %v430
        %432 = vst [vmem:[%s346] sm:$0xff] %v431
        %v433 = vstv %s377
        %v434 = vmul.f32 %v433, %v426
        %v435 = vmul.f32 %v401, %v434
        %v436 = vstv %s381
        %v437 = vadd.f32 %v435, %v436
        %s438 = scalar_lea.vmem %s346, 8
        %439 = vst [vmem:[%s438] sm:$0xff] %v437
        %p440 = scmp.lt.s32.totalorder %s24, 1
        %s441 = scalar_select %p440, %s24, 1
        %p442 = scmp.lt.s32.totalorder %s25, 0
        %s443 = scalar_select %p442, %s25, 0
        %s444 = smul.addr %s441, 2
        %s445 = sadd.s32 %s443, %s444
        %s446 = smul.addr %s445, 8
        %s447 = scalar_lea.vmem %s6, %s446
        // Predicated region
        $region65: #{perspective_camera_holo_channel_major.1} parent=43 // pred_check
          %p448 = pneg %p185
        $region66: #{perspective_camera_holo_channel_major.1} parent=43 // pred_check_branch
          %450 = sbr.rel (%p448) target = $region68
        $region67: #{perspective_camera_holo_channel_major.1} parent=43 // pred_region
          _
        $region68: #{perspective_camera_holo_channel_major.1} parent=43 // pred_fallthru
          _
      $region44: #{perspective_camera_holo_channel_major.1} parent=5 // pred_fallthru
        _
      %p451 = scmp.le.s32.totalorder 2, %s15
      // Predicated region
      $region69: #{perspective_camera_holo_channel_major.1} parent=5 // pred_check
        %p452 = pneg %p451
      $region70: #{perspective_camera_holo_channel_major.1} parent=5 // pred_check_branch
        %454 = sbr.rel (%p452) target = $region72
      $region71: #{perspective_camera_holo_channel_major.1} parent=5 // pred_region
        %s455 = ssub.s32 %s15, 2
        // Predicated region
        $region73: #{perspective_camera_holo_channel_major.1} parent=71 // pred_check
          %p456 = pneg %p191
        $region74: #{perspective_camera_holo_channel_major.1} parent=71 // pred_check_branch
          %458 = sbr.rel (%p456) target = $region76
        $region75: #{perspective_camera_holo_channel_major.1} parent=71 // pred_region
          %p459 = scmp.lt.s32.totalorder %s26, 1
          %s460 = scalar_select %p459, %s26, 1
          %p461 = scmp.lt.s32.totalorder %s27, 0
          %s462 = scalar_select %p461, %s27, 0
          %s463 = smul.addr %s460, 2
          %s464 = sadd.s32 %s462, %s463
          %s465 = smul.addr %s464, 8
          %s466 = scalar_lea.vmem %s6, %s465
        $region76: #{perspective_camera_holo_channel_major.1} parent=71 // pred_fallthru
          _
      $region72: #{perspective_camera_holo_channel_major.1} parent=5 // pred_fallthru
        _
    $region6: #{perspective_camera_holo_channel_major.1} parent=1 // loop_footer
      %s19 = sadd.s32 1, %s15
    $region7: #{perspective_camera_holo_channel_major.1} parent=1 // loop_footer_branch
      %14 = sbr.rel target = $region3
    $region8: #{perspective_camera_holo_channel_major.1} parent=1 // loop_exit
      _
    %467 = vsyncpa [#allocation3], 1
    %s468 = scalar_lea.sflag [#allocation3], 1
    %469 = vsyncpa %s468, 1
    %470 = vsyncpa [#allocation5], 1
    %471 = vsyncpa [#allocation8], 1

</llo_original>
